<compile_context>
chip_gen: v7x
topology: tpu7x:2x2x1
jax: 0.10.0
libtpu: 0.0.40
codegen_flags: <defaults>
</compile_context>

<pallas_src>
import math

import jax
import jax.numpy as jnp
from jax.experimental import pallas as pl
from jax.experimental.pallas import tpu as pltpu

LANES = 128
SUBLANE_PACK = 32            # row granularity safe for f32 / bf16 / int8 blocks
MAX_TILE_ROWS = 8192         # flat path: 8192 x 128 f32 = 4 MiB per input block
PLANE_TILE_ROWS = 4096       # channel_main path: cap block at ~2 MiB f32 input
NUM_CORE_SPLITS = 2          # leading "parallel" axis -> v7x two-TensorCore split
VMEM_LIMIT_BYTES = 32 * 1024 * 1024
_LN2 = math.log(2.0)
_FLOPS_PER_ELEM = 20
_TRANS_PER_ELEM = 3          # exp, reciprocal, log


def _round_up(x, m):
    return ((x + m - 1) // m) * m


def _pick_tile_rows(num_rows, max_tile):
    """Largest 32-multiple tile <= max_tile (and <= num_rows) leaving a tiny tail.

    Caller guarantees num_rows >= 32.  Full tiles always divide the grid exactly
    (no partial blocks); the remainder (< one tile) is reduced in plain JAX.
    """
    k = -(-num_rows // max_tile)                      # number of tiles aimed for
    return max(SUBLANE_PACK, ((num_rows // k) // SUBLANE_PACK) * SUBLANE_PACK)


def _elementwise_terms(pr, gt, gamma):
    """Per-element math on f32 logits `pr` and binary {0,1} f32 targets `gt`.

    Returns (gt*sigmoid(pr), sigmoid(pr), gt, focal_elementwise).
    One exp + one log + one EUP reciprocal per element; gamma == 2 needs no
    further transcendentals.  Targets are assumed binary (segmentation masks).
    """
    e = jnp.exp(-jnp.abs(pr))                         # shared EUP exp
    recip = pl.reciprocal(1.0 + e, approx=True)       # EUP, frees the VALU slot
    sig_neg = e * recip                               # sigmoid(-|pr|)
    sig = jnp.where(pr >= 0.0, recip, sig_neg)        # stable sigmoid(pr)
    log1p_e = jnp.log(1.0 + e)                        # shared by BCE & logsigmoid
    # z = -pr*(2*gt - 1).  For binary gt the PyTorch BCE-with-logits form
    #   pr - pr*gt + max(-pr,0) + log(exp(-max)+exp(-pr-max))
    # is exactly max(z, 0) + log(1 + exp(-|pr|)).
    z = pr * (1.0 - 2.0 * gt)
    bce = jnp.maximum(z, 0.0) + log1p_e
    if float(gamma) == 2.0:
        # modulator = exp(2*logsigmoid(z)) = sigmoid(z)^2, and |z| == |pr|.
        p_t = jnp.where(z >= 0.0, recip, sig_neg)
        mod = p_t * p_t
    else:
        # logsigmoid(z) = min(z,0) - log(1+exp(-|z|)); |z| == |pr| for binary gt.
        mod = jnp.exp(float(gamma) * (jnp.minimum(z, 0.0) - log1p_e))
    focal = mod * bce
    return gt * sig, sig, gt, focal


def _make_sum_kernel(gamma):
    """Shared kernel: streams (tile, 128) blocks into a (4, 8, 128) accumulator."""

    def kernel(pr_ref, gt_ref, acc_ref):
        @pl.when(pl.program_id(1) == 0)
        def _():
            acc_ref[...] = jnp.zeros_like(acc_ref)

        pr = pr_ref[...].astype(jnp.float32)          # (tile_rows, 128)
        gt = gt_ref[...].astype(jnp.float32)
        rows, lanes = pr.shape
        tp_e, spr_e, sgt_e, f_e = _elementwise_terms(pr, gt, gamma)

        def part(x):
            # (rows,128) -> (8,128) vreg-aligned partial: pure VPU adds.
            return jnp.sum(x.reshape(rows // 8, 8, lanes), axis=0)

        acc_ref[0] += part(tp_e)
        acc_ref[1] += part(spr_e)
        acc_ref[2] += part(sgt_e)
        acc_ref[3] += part(f_e)

    return kernel


def _sums_jax(pr, gt, gamma, axes=None):
    """Exact JAX sums [tp, sum_sigmoid, sum_gt, focal_sum] for tiny tails."""
    pr = pr.astype(jnp.float32)
    gt = gt.astype(jnp.float32)
    sig = jax.nn.sigmoid(pr)
    max_val = jnp.maximum(-pr, 0.0)
    bce = pr - pr * gt + max_val + jnp.log(jnp.exp(-max_val) + jnp.exp(-pr - max_val))
    focal = jnp.exp(gamma * jax.nn.log_sigmoid(-pr * (gt * 2.0 - 1.0))) * bce
    return jnp.stack([jnp.sum(gt * sig, axis=axes), jnp.sum(sig, axis=axes),
                      jnp.sum(gt, axis=axes), jnp.sum(focal, axis=axes)], axis=-1)


# ---------------------------------------------------------------------------
# Flat path (channel_main is None): global sums over everything.
# ---------------------------------------------------------------------------
def _flat_sums(y_pr, y_gt, gamma):
    """Returns ((4,) sums [tp, sum_sig, sum_gt, focal_sum], n, zero_pad_count)."""
    n = math.prod(y_pr.shape)
    gt = y_gt
    if gt.dtype == jnp.bool_:
        gt = gt.astype(jnp.int8)

    if n % LANES == 0 and n // LANES >= SUBLANE_PACK:
        # Zero-copy lane-dense view of the original tensors (the common case).
        rows = n // LANES
        pr2 = y_pr.reshape(rows, LANES)
        gt2 = gt.reshape(rows, LANES)
        host_pad = 0
    else:
        # TODO(synk): ragged (n % 128 != 0) or tiny inputs still pay one small
        # host-side zero pad; the pad contribution is removed analytically.
        rows = _round_up(max(-(-n // LANES), 1), SUBLANE_PACK)
        host_pad = rows * LANES - n
        pr2 = jnp.pad(y_pr.reshape(-1), (0, host_pad)).reshape(rows, LANES)
        gt2 = jnp.pad(gt.reshape(-1), (0, host_pad)).reshape(rows, LANES)

    tile_rows = _pick_tile_rows(rows, MAX_TILE_ROWS)
    num_full = rows // tile_rows
    splits = (NUM_CORE_SPLITS
              if (num_full >= 4 and num_full % NUM_CORE_SPLITS == 0) else 1)
    tiles_per_split = num_full // splits

    elems = num_full * tile_rows * LANES
    acc = pl.pallas_call(
        _make_sum_kernel(gamma),
        out_shape=jax.ShapeDtypeStruct((splits, 4, 8, LANES), jnp.float32),
        grid=(splits, tiles_per_split),
        in_specs=[
            pl.BlockSpec((tile_rows, LANES),
                         lambda c, i: (c * tiles_per_split + i, 0)),
            pl.BlockSpec((tile_rows, LANES),
                         lambda c, i: (c * tiles_per_split + i, 0)),
        ],
        out_specs=pl.BlockSpec((None, 4, 8, LANES), lambda c, i: (c, 0, 0, 0)),
        compiler_params=pltpu.CompilerParams(
            dimension_semantics=("parallel", "arbitrary"),
            vmem_limit_bytes=VMEM_LIMIT_BYTES),
        cost_estimate=pl.CostEstimate(
            flops=_FLOPS_PER_ELEM * elems,
            transcendentals=_TRANS_PER_ELEM * elems,
            bytes_accessed=elems * (pr2.dtype.itemsize + gt2.dtype.itemsize)
            + splits * 4 * 8 * LANES * 4),
    )(pr2, gt2)
    sums = jnp.sum(acc, axis=(0, 2, 3))               # (4,)

    # Ragged row tail (< one tile): tiny exact JAX reduction (no extra HBM pass).
    if num_full * tile_rows != rows:
        start = num_full * tile_rows
        sums = sums + _sums_jax(pr2[start:], gt2[start:], gamma)

    return sums, n, host_pad


# ---------------------------------------------------------------------------
# channel_main path: one lane-dense pass producing per-(batch, channel) sums.
# ---------------------------------------------------------------------------
def _per_channel_sums(y_pr, y_gt, gamma):
    """One pass over (B,C,H,W); returns ((C, 4) sums over batch+spatial, plane)."""
    B, C = y_pr.shape[0], y_pr.shape[1]
    plane = math.prod(y_pr.shape[2:])
    gt = y_gt
    if gt.dtype == jnp.bool_:
        gt = gt.astype(jnp.int8)

    n_planes = B * C
    if plane % LANES == 0 and plane // LANES >= SUBLANE_PACK:
        s_rows = plane // LANES
        pr3 = y_pr.reshape(n_planes, s_rows, LANES)   # zero-copy view
        gt3 = gt.reshape(n_planes, s_rows, LANES)
        pad_pp = 0
    else:
        # TODO(synk): ragged/small planes pay one small per-plane zero pad.
        s_rows = _round_up(max(-(-plane // LANES), 1), SUBLANE_PACK)
        pad_pp = s_rows * LANES - plane
        pr3 = jnp.pad(y_pr.reshape(n_planes, plane),
                      ((0, 0), (0, pad_pp))).reshape(n_planes, s_rows, LANES)
        gt3 = jnp.pad(gt.reshape(n_planes, plane),
                      ((0, 0), (0, pad_pp))).reshape(n_planes, s_rows, LANES)

    tile_sp = _pick_tile_rows(s_rows, PLANE_TILE_ROWS)
    num_full = s_rows // tile_sp

    elems = n_planes * num_full * tile_sp * LANES
    acc = pl.pallas_call(
        _make_sum_kernel(gamma),
        out_shape=jax.ShapeDtypeStruct((n_planes, 4, 8, LANES), jnp.float32),
        grid=(n_planes, num_full),
        in_specs=[
            pl.BlockSpec((None, tile_sp, LANES), lambda p, s: (p, s, 0)),
            pl.BlockSpec((None, tile_sp, LANES), lambda p, s: (p, s, 0)),
        ],
        out_specs=pl.BlockSpec((None, 4, 8, LANES), lambda p, s: (p, 0, 0, 0)),
        compiler_params=pltpu.CompilerParams(
            dimension_semantics=("parallel", "arbitrary"),
            vmem_limit_bytes=VMEM_LIMIT_BYTES),
        cost_estimate=pl.CostEstimate(
            flops=_FLOPS_PER_ELEM * elems,
            transcendentals=_TRANS_PER_ELEM * elems,
            bytes_accessed=elems * (pr3.dtype.itemsize + gt3.dtype.itemsize)
            + n_planes * 4 * 8 * LANES * 4),
    )(pr3, gt3)
    per_plane = jnp.sum(acc, axis=(2, 3))              # (B*C, 4)

    if num_full * tile_sp != s_rows:                    # tiny per-plane tail
        start = num_full * tile_sp
        per_plane = per_plane + _sums_jax(pr3[:, start:, :], gt3[:, start:, :],
                                          gamma, axes=(1, 2))

    per_ch = jnp.sum(per_plane.reshape(B, C, 4), axis=0)  # (C, 4)
    if pad_pp:
        # Each zero pad element (pr=0, gt=0) contributed sigmoid(0)=0.5 to
        # sum(sigmoid) and 0.5**gamma * ln2 to the focal sum; remove it.
        comp = jnp.array([0.0, 0.5, 0.0, (0.5 ** gamma) * _LN2], jnp.float32)
        per_ch = per_ch - (B * pad_pp) * comp
    return per_ch, plane


# ---------------------------------------------------------------------------
# Loss glue (plain JAX on a handful of scalars).
# ---------------------------------------------------------------------------
def dice_focal_loss(y_pr, y_gt, eps=1.0, gamma=2.0, channel_main=None):
    """JAX/Pallas equivalent of DiceFocalLoss.forward for (B, C, H, W) inputs.

    y_pr: logits (f32 or bf16, streamed natively -- bf16 recommended on the
    memory-bound v5e/v6e). y_gt: binary {0,1} masks (bool / int8 / float),
    streamed natively and cast to f32 inside the kernel.
    """
    eps = float(eps)
    gamma = float(gamma)

    if channel_main is None:
        sums, n, host_pad = _flat_sums(y_pr, y_gt, gamma)
        tp, s_pr, s_gt, f_sum = sums[0], sums[1], sums[2], sums[3]
        if host_pad:
            # Analytic compensation for host-side zero padding (pr=0, gt=0).
            s_pr = s_pr - host_pad * 0.5
            f_sum = f_sum - host_pad * (0.5 ** gamma) * _LN2
        dice = 1.0 - (2.0 * tp + eps) / (s_gt + s_pr + eps)
        focal = f_sum / n
        return 0.5 * dice + 0.5 * focal

    # ---- channel_main: single pass + cheap per-group combination in JAX ----
    B, C = y_pr.shape[0], y_pr.shape[1]
    per_ch, plane = _per_channel_sums(y_pr, y_gt, gamma)     # (C, 4)

    main = [int(c) for c in channel_main]
    not_main = [c for c in range(C) if c not in set(main)]

    def group_loss(idxs):
        g = per_ch[jnp.asarray(idxs, dtype=jnp.int32)]        # tiny (len, 4) gather
        tp, s_pr = g[:, 0].sum(), g[:, 1].sum()
        s_gt, f_sum = g[:, 2].sum(), g[:, 3].sum()
        n_g = B * len(idxs) * plane
        dice = 1.0 - (2.0 * tp + eps) / (s_gt + s_pr + eps)
        focal = f_sum / n_g
        return dice, focal

    dice_m, focal_m = group_loss(main)
    dice_n, focal_n = group_loss(not_main)
    return 0.4 * dice_m + 0.4 * focal_m + 0.1 * dice_n + 0.1 * focal_n


# ---------------------------------------------------------------------------
# Pure-JAX reference (mirrors the PyTorch module) for the self-check.
# ---------------------------------------------------------------------------
def _reference_loss(y_pr, y_gt, eps=1.0, gamma=2.0, channel_main=None):
    y_pr = y_pr.astype(jnp.float32)
    y_gt = y_gt.astype(jnp.float32)

    def focal(pr, gt):
        max_val = jnp.maximum(-pr, 0.0)
        loss = pr - pr * gt + max_val + jnp.log(jnp.exp(-max_val)
                                                + jnp.exp(-pr - max_val))
        invprobs = jax.nn.log_sigmoid(-pr * (gt * 2.0 - 1.0))
        return jnp.mean(jnp.exp(invprobs * gamma) * loss)

    def dice(pr, gt):
        sig = jax.nn.sigmoid(pr)
        tp = jnp.sum(gt * sig)
        return 1.0 - (2.0 * tp + eps) / (jnp.sum(gt) + jnp.sum(sig) + eps)

    if channel_main is None:
        return 0.5 * dice(y_pr, y_gt) + 0.5 * focal(y_pr, y_gt)
    C = y_pr.shape[1]
    main = list(channel_main)
    not_main = [c for c in range(C) if c not in set(main)]
    pm, gm = y_pr[:, main], y_gt[:, main]
    pn, gn = y_pr[:, not_main], y_gt[:, not_main]
    return (0.4 * dice(pm, gm) + 0.4 * focal(pm, gm)
            + 0.1 * dice(pn, gn) + 0.1 * focal(pn, gn))


if __name__ == "__main__":
    key = jax.random.PRNGKey(0)
    k1, k2 = jax.random.split(key)
    B, C, H, W = 2, 4, 64, 64
    y_pr = jax.random.normal(k1, (B, C, H, W), dtype=jnp.float32)          # logits
    y_gt = (jax.random.uniform(k2, (B, C, H, W)) > 0.5).astype(jnp.int8)   # 0/1 masks

    loss_fn = jax.jit(dice_focal_loss,
                      static_argnames=("eps", "gamma", "channel_main"))

    loss = jax.block_until_ready(loss_fn(y_pr, y_gt, eps=1.0, gamma=2.0))
    loss_cm = jax.block_until_ready(
        loss_fn(y_pr, y_gt, eps=1.0, gamma=2.0, channel_main=(0, 1)))

    ref = _reference_loss(y_pr, y_gt, eps=1.0, gamma=2.0)
    ref_cm = _reference_loss(y_pr, y_gt, eps=1.0, gamma=2.0, channel_main=(0, 1))

    def _close(a, b):
        a, b = float(a), float(b)
        return abs(a - b) <= 5e-3 + 5e-2 * abs(b)

    if not (_close(loss, ref) and _close(loss_cm, ref_cm)):
        raise SystemExit(
            "MISMATCH: pallas=({:.6f}, {:.6f}) ref=({:.6f}, {:.6f})".format(
                float(loss), float(loss_cm), float(ref), float(ref_cm)))
    print("KERNEL_OK")
</pallas_src>

<mosaic_0001>
module attributes {stable_mosaic.version = 11 : i64} {
  func.func @kernel(%arg0: i32, %arg1: i32, %arg2: memref<256x128xf32, #tpu.memory_space<vmem>>, %arg3: memref<256x128xi8, #tpu.memory_space<vmem>>, %arg4: memref<1x4x8x128xf32, #tpu.memory_space<vmem>>) attributes {dimension_semantics = [#tpu.dimension_semantics<parallel>, #tpu.dimension_semantics<arbitrary>], iteration_bounds = array<i64: 1, 1>, scalar_prefetch = 0 : i64, scratch_operands = 0 : i64, tpu.core_type = #tpu.core_type<tc>, window_params = [{transform_indices = @transform_0, window_bounds = array<i64: 256, 128>}, {transform_indices = @transform_1, window_bounds = array<i64: 256, 128>}, {transform_indices = @transform_2, window_bounds = array<i64: 1, 4, 8, 128>}]} {
    %c0_i32 = arith.constant 0 : i32
    %0 = arith.cmpi eq, %arg1, %c0_i32 : i32
    %1 = arith.extui %0 : i1 to i32
    %c0_i32_0 = arith.constant 0 : i32
    %2 = arith.cmpi ne, %1, %c0_i32_0 : i32
    scf.if %2 {
      %cst_44 = arith.constant 0.000000e+00 : f32
      %66 = vector.broadcast %cst_44 : f32 to vector<4x8x128xf32>
      %c0_45 = arith.constant 0 : index
      %c0_46 = arith.constant 0 : index
      %c0_47 = arith.constant 0 : index
      %c0_48 = arith.constant 0 : index
      %67 = vector.load %arg4[%c0_45, %c0_46, %c0_47, %c0_48] : memref<1x4x8x128xf32, #tpu.memory_space<vmem>>, vector<1x4x8x128xf32>
      %68 = vector.shape_cast %67 : vector<1x4x8x128xf32> to vector<4x8x128xf32>
      %69 = vector.shape_cast %66 : vector<4x8x128xf32> to vector<1x4x8x128xf32>
      tpu.vector_store %arg4[%c0_45, %c0_46, %c0_47, %c0_48], %69 {strides = array<i32>} : memref<1x4x8x128xf32, #tpu.memory_space<vmem>>, vector<1x4x8x128xf32>,
    } else {
    }
    %c0 = arith.constant 0 : index
    %c0_1 = arith.constant 0 : index
    %3 = vector.load %arg2[%c0, %c0_1] : memref<256x128xf32, #tpu.memory_space<vmem>>, vector<256x128xf32>
    %c0_2 = arith.constant 0 : index
    %c0_3 = arith.constant 0 : index
    %4 = vector.load %arg3[%c0_2, %c0_3] : memref<256x128xi8, #tpu.memory_space<vmem>>, vector<256x128xi8>
    %5 = arith.sitofp %4 : vector<256x128xi8> to vector<256x128xf32>
    %6 = math.absf %3 : vector<256x128xf32>
    %cst = arith.constant 0.000000e+00 : f32
    %7 = vector.broadcast %cst : f32 to vector<256x128xf32>
    %8 = arith.subf %7, %6 : vector<256x128xf32>
    %9 = math.exp %8 : vector<256x128xf32>
    %cst_4 = arith.constant 1.000000e+00 : f32
    %10 = vector.broadcast %cst_4 : f32 to vector<256x128xf32>
    %11 = arith.addf %10, %9 : vector<256x128xf32>
    %12 = tpu.reciprocal %11 {approx = true} : vector<256x128xf32> -> vector<256x128xf32>
    %13 = arith.mulf %9, %12 : vector<256x128xf32>
    %cst_5 = arith.constant 0.000000e+00 : f32
    %14 = vector.broadcast %cst_5 : f32 to vector<256x128xf32>
    %15 = arith.cmpf oge, %3, %14 : vector<256x128xf32>
    %16 = arith.select %15, %12, %13 : vector<256x128xi1>, vector<256x128xf32>
    %cst_6 = arith.constant 1.000000e+00 : f32
    %17 = vector.broadcast %cst_6 : f32 to vector<256x128xf32>
    %18 = arith.addf %17, %9 : vector<256x128xf32>
    %19 = math.log %18 : vector<256x128xf32>
    %cst_7 = arith.constant 2.000000e+00 : f32
    %20 = vector.broadcast %cst_7 : f32 to vector<256x128xf32>
    %21 = arith.mulf %20, %5 : vector<256x128xf32>
    %cst_8 = arith.constant 1.000000e+00 : f32
    %22 = vector.broadcast %cst_8 : f32 to vector<256x128xf32>
    %23 = arith.subf %22, %21 : vector<256x128xf32>
    %24 = arith.mulf %3, %23 : vector<256x128xf32>
    %cst_9 = arith.constant 0.000000e+00 : f32
    %25 = vector.broadcast %cst_9 : f32 to vector<256x128xf32>
    %26 = arith.maximumf %24, %25 : vector<256x128xf32>
    %27 = arith.addf %26, %19 : vector<256x128xf32>
    %cst_10 = arith.constant 0.000000e+00 : f32
    %28 = vector.broadcast %cst_10 : f32 to vector<256x128xf32>
    %29 = arith.cmpf oge, %24, %28 : vector<256x128xf32>
    %30 = arith.select %29, %12, %13 : vector<256x128xi1>, vector<256x128xf32>
    %31 = arith.mulf %30, %30 : vector<256x128xf32>
    %32 = arith.mulf %31, %27 : vector<256x128xf32>
    %33 = arith.mulf %5, %16 : vector<256x128xf32>
    %c0_11 = arith.constant 0 : index
    %c0_12 = arith.constant 0 : index
    %c0_13 = arith.constant 0 : index
    %c0_14 = arith.constant 0 : index
    %34 = vector.load %arg4[%c0_11, %c0_12, %c0_13, %c0_14] : memref<1x4x8x128xf32, #tpu.memory_space<vmem>>, vector<1x1x8x128xf32>
    %35 = vector.shape_cast %34 : vector<1x1x8x128xf32> to vector<8x128xf32>
    %36 = vector.shape_cast %33 : vector<256x128xf32> to vector<32x8x128xf32>
    %cst_15 = arith.constant dense<0.000000e+00> : vector<8x128xf32>
    %37 = vector.multi_reduction <add>, %36, %cst_15 [0] : vector<32x8x128xf32> to vector<8x128xf32>
    %38 = arith.addf %35, %37 : vector<8x128xf32>
    %c0_16 = arith.constant 0 : index
    %c0_17 = arith.constant 0 : index
    %c0_18 = arith.constant 0 : index
    %c0_19 = arith.constant 0 : index
    %39 = vector.load %arg4[%c0_16, %c0_17, %c0_18, %c0_19] : memref<1x4x8x128xf32, #tpu.memory_space<vmem>>, vector<1x1x8x128xf32>
    %40 = vector.shape_cast %39 : vector<1x1x8x128xf32> to vector<8x128xf32>
    %41 = vector.shape_cast %38 : vector<8x128xf32> to vector<1x1x8x128xf32>
    tpu.vector_store %arg4[%c0_16, %c0_17, %c0_18, %c0_19], %41 {strides = array<i32>} : memref<1x4x8x128xf32, #tpu.memory_space<vmem>>, vector<1x1x8x128xf32>,
    %c0_20 = arith.constant 0 : index
    %c1 = arith.constant 1 : index
    %c0_21 = arith.constant 0 : index
    %c0_22 = arith.constant 0 : index
    %42 = vector.load %arg4[%c0_20, %c1, %c0_21, %c0_22] : memref<1x4x8x128xf32, #tpu.memory_space<vmem>>, vector<1x1x8x128xf32>
    %43 = vector.shape_cast %42 : vector<1x1x8x128xf32> to vector<8x128xf32>
    %44 = vector.shape_cast %16 : vector<256x128xf32> to vector<32x8x128xf32>
    %cst_23 = arith.constant dense<0.000000e+00> : vector<8x128xf32>
    %45 = vector.multi_reduction <add>, %44, %cst_23 [0] : vector<32x8x128xf32> to vector<8x128xf32>
    %46 = arith.addf %43, %45 : vector<8x128xf32>
    %c0_24 = arith.constant 0 : index
    %c1_25 = arith.constant 1 : index
    %c0_26 = arith.constant 0 : index
    %c0_27 = arith.constant 0 : index
    %47 = vector.load %arg4[%c0_24, %c1_25, %c0_26, %c0_27] : memref<1x4x8x128xf32, #tpu.memory_space<vmem>>, vector<1x1x8x128xf32>
    %48 = vector.shape_cast %47 : vector<1x1x8x128xf32> to vector<8x128xf32>
    %49 = vector.shape_cast %46 : vector<8x128xf32> to vector<1x1x8x128xf32>
    tpu.vector_store %arg4[%c0_24, %c1_25, %c0_26, %c0_27], %49 {strides = array<i32>} : memref<1x4x8x128xf32, #tpu.memory_space<vmem>>, vector<1x1x8x128xf32>,
    %c0_28 = arith.constant 0 : index
    %c2 = arith.constant 2 : index
    %c0_29 = arith.constant 0 : index
    %c0_30 = arith.constant 0 : index
    %50 = vector.load %arg4[%c0_28, %c2, %c0_29, %c0_30] : memref<1x4x8x128xf32, #tpu.memory_space<vmem>>, vector<1x1x8x128xf32>
    %51 = vector.shape_cast %50 : vector<1x1x8x128xf32> to vector<8x128xf32>
    %52 = vector.shape_cast %5 : vector<256x128xf32> to vector<32x8x128xf32>
    %cst_31 = arith.constant dense<0.000000e+00> : vector<8x128xf32>
    %53 = vector.multi_reduction <add>, %52, %cst_31 [0] : vector<32x8x128xf32> to vector<8x128xf32>
    %54 = arith.addf %51, %53 : vector<8x128xf32>
    %c0_32 = arith.constant 0 : index
    %c2_33 = arith.constant 2 : index
    %c0_34 = arith.constant 0 : index
    %c0_35 = arith.constant 0 : index
    %55 = vector.load %arg4[%c0_32, %c2_33, %c0_34, %c0_35] : memref<1x4x8x128xf32, #tpu.memory_space<vmem>>, vector<1x1x8x128xf32>
    %56 = vector.shape_cast %55 : vector<1x1x8x128xf32> to vector<8x128xf32>
    %57 = vector.shape_cast %54 : vector<8x128xf32> to vector<1x1x8x128xf32>
    tpu.vector_store %arg4[%c0_32, %c2_33, %c0_34, %c0_35], %57 {strides = array<i32>} : memref<1x4x8x128xf32, #tpu.memory_space<vmem>>, vector<1x1x8x128xf32>,
    %c0_36 = arith.constant 0 : index
    %c3 = arith.constant 3 : index
    %c0_37 = arith.constant 0 : index
    %c0_38 = arith.constant 0 : index
    %58 = vector.load %arg4[%c0_36, %c3, %c0_37, %c0_38] : memref<1x4x8x128xf32, #tpu.memory_space<vmem>>, vector<1x1x8x128xf32>
    %59 = vector.shape_cast %58 : vector<1x1x8x128xf32> to vector<8x128xf32>
    %60 = vector.shape_cast %32 : vector<256x128xf32> to vector<32x8x128xf32>
    %cst_39 = arith.constant dense<0.000000e+00> : vector<8x128xf32>
    %61 = vector.multi_reduction <add>, %60, %cst_39 [0] : vector<32x8x128xf32> to vector<8x128xf32>
    %62 = arith.addf %59, %61 : vector<8x128xf32>
    %c0_40 = arith.constant 0 : index
    %c3_41 = arith.constant 3 : index
    %c0_42 = arith.constant 0 : index
    %c0_43 = arith.constant 0 : index
    %63 = vector.load %arg4[%c0_40, %c3_41, %c0_42, %c0_43] : memref<1x4x8x128xf32, #tpu.memory_space<vmem>>, vector<1x1x8x128xf32>
    %64 = vector.shape_cast %63 : vector<1x1x8x128xf32> to vector<8x128xf32>
    %65 = vector.shape_cast %62 : vector<8x128xf32> to vector<1x1x8x128xf32>
    tpu.vector_store %arg4[%c0_40, %c3_41, %c0_42, %c0_43], %65 {strides = array<i32>} : memref<1x4x8x128xf32, #tpu.memory_space<vmem>>, vector<1x1x8x128xf32>,
    return
  }
  func.func @transform_0(%arg0: i32, %arg1: i32) -> (i32, i32) {
    %c1_i32 = arith.constant 1 : i32
    %0 = arith.muli %arg0, %c1_i32 : i32
    %1 = arith.addi %0, %arg1 : i32
    %c0_i32 = arith.constant 0 : i32
    %c0_i32_0 = arith.constant 0 : i32
    return %1, %c0_i32 : i32, i32
  }
  func.func @transform_1(%arg0: i32, %arg1: i32) -> (i32, i32) {
    %c1_i32 = arith.constant 1 : i32
    %0 = arith.muli %arg0, %c1_i32 : i32
    %1 = arith.addi %0, %arg1 : i32
    %c0_i32 = arith.constant 0 : i32
    %c0_i32_0 = arith.constant 0 : i32
    return %1, %c0_i32 : i32, i32
  }
  func.func @transform_2(%arg0: i32, %arg1: i32) -> (i32, i32, i32, i32) {
    %c0_i32 = arith.constant 0 : i32
    %c0_i32_0 = arith.constant 0 : i32
    %c0_i32_1 = arith.constant 0 : i32
    %c0_i32_2 = arith.constant 0 : i32
    return %arg0, %c0_i32, %c0_i32_0, %c0_i32_1 : i32, i32, i32, i32
  }
}

</mosaic_0001>

<llo_original>
// kernel: dice_focal_loss.1
$region0: #{dice_focal_loss.1}
  #allocation0 [shape = 'u32[]', space=smem, size = 0x4, offset = 0x4, fixed_abs, tag = 'smem constant byte address 0x4 - core index']
  #allocation1 [shape = 'u32[144,128]{1,0:T(1,128)}', space=vmem, size = 0x12000, scoped, tag = 'internal scratch']
  %s0 = inlined_call_operand.vmem [shape: f32[256,128], index: 0, kind: input, shape index: {}]
  %s1 = inlined_call_operand.vmem [shape: s8[256,128], index: 1, kind: input, shape index: {}]
  %s2 = inlined_call_operand.vmem [shape: f32[1,4,8,128], index: 2, kind: output, shape index: {}]
  %s3 = sld [smem:[#allocation0]]
  $region22: #{dice_focal_loss.1} parent=0
    _
  %s5 = ssub.s32 1, %s3
  %s6 = scalar_select 0, %s5, %s3
  // Predicated region
  $region2: #{dice_focal_loss.1} parent=0 // pred_check
    _
  $region3: #{dice_focal_loss.1} parent=0 // pred_check_branch
    %8 = sbr.rel (0) target = $region5
  $region4: #{dice_focal_loss.1} parent=0 // pred_region
    %s9 = sadd.s32 0, 0
    %s10 = smul.u32 32, %s9
    %p11 = scmp.lt.s32.totalorder %s10, 31
    %s12 = scalar_select %p11, %s10, 31
    %s13 = smul.addr %s12, 8
    %s14 = scalar_lea.vmem %s0, %s13
    %s15 = sadd.s32 0, 0
    %s16 = smul.u32 32, %s15
  $region5: #{dice_focal_loss.1} parent=0 // pred_fallthru
    _
  // Predicated region
  $region6: #{dice_focal_loss.1} parent=0 // pred_check
    _
  $region7: #{dice_focal_loss.1} parent=0 // pred_check_branch
    %18 = sbr.rel (0) target = $region9
  $region8: #{dice_focal_loss.1} parent=0 // pred_region
    %s19 = sadd.s32 0, 0
    %s20 = smul.u32 8, %s19
    %p21 = scmp.lt.s32.totalorder %s20, 7
    %s22 = scalar_select %p21, %s20, 7
    %s23 = smul.addr %s22, 8
    %s24 = scalar_lea.vmem %s1, %s23
    %s25 = sadd.s32 0, 0
    %s26 = smul.u32 8, %s25
  $region9: #{dice_focal_loss.1} parent=0 // pred_fallthru
    _
  %s27 = sadd.s32 0, 0
  %s28 = smul.u32 32, %s27
  %p29 = scmp.lt.s32.totalorder %s28, 31
  %s30 = scalar_select %p29, %s28, 31
  %s31 = smul.addr %s30, 8
  %s32 = scalar_lea.vmem %s0, %s31
  %s33 = sadd.s32 0, 0
  %s34 = smul.u32 8, %s33
  %p35 = scmp.lt.s32.totalorder %s34, 7
  %s36 = scalar_select %p35, %s34, 7
  %s37 = smul.addr %s36, 8
  %s38 = scalar_lea.vmem %s1, %s37
  %s39 = sadd.s32 0, 0
  %s40 = smul.u32 32, %s39
  %p41 = scmp.lt.s32.totalorder %s40, 31
  %s42 = scalar_select %p41, %s40, 31
  %s43 = smul.addr %s42, 8
  %s44 = scalar_lea.vmem %s0, %s43
  %s45 = sadd.s32 0, 0
  %s46 = smul.u32 32, %s45
  %s47 = sadd.s32 0, 0
  %s48 = smul.u32 8, %s47
  %p49 = scmp.lt.s32.totalorder %s48, 7
  %s50 = scalar_select %p49, %s48, 7
  %s51 = smul.addr %s50, 8
  %s52 = scalar_lea.vmem %s1, %s51
  %s53 = sadd.s32 0, 0
  %s54 = smul.u32 8, %s53
  %p55 = scmp.eq.s32.totalorder 0, 0
  // Predicated region
  $region10: #{dice_focal_loss.1} parent=0 // pred_check
    %p56 = pneg %p55
  $region11: #{dice_focal_loss.1} parent=0 // pred_check_branch
    %58 = sbr.rel (%p56) target = $region13
  $region12: #{dice_focal_loss.1} parent=0 // pred_region
    %59 = vst [vmem:[%s2] sm:$0xff] 0.0
    %60 = vst [vmem:[%s2 + $0x8] sm:$0xff] 0.0
    %61 = vst [vmem:[%s2 + $0x10] sm:$0xff] 0.0
    %62 = vst [vmem:[%s2 + $0x18] sm:$0xff] 0.0
  $region13: #{dice_focal_loss.1} parent=0 // pred_fallthru
    _
  %v63 = vld [vmem:[%s44] sm:$0xff]
  %v64 = vld [vmem:[%s44 + $0x8] sm:$0xff]
  %v65 = vld [vmem:[%s44 + $0x10] sm:$0xff]
  %v66 = vld [vmem:[%s44 + $0x18] sm:$0xff]
  %v67 = vld [vmem:[%s44 + $0x20] sm:$0xff]
  %v68 = vld [vmem:[%s44 + $0x28] sm:$0xff]
  %v69 = vld [vmem:[%s44 + $0x30] sm:$0xff]
  %v70 = vld [vmem:[%s44 + $0x38] sm:$0xff]
  %v71 = vld [vmem:[%s44 + $0x40] sm:$0xff]
  %v72 = vld [vmem:[%s44 + $0x48] sm:$0xff]
  %v73 = vld [vmem:[%s44 + $0x50] sm:$0xff]
  %v74 = vld [vmem:[%s44 + $0x58] sm:$0xff]
  %v75 = vld [vmem:[%s44 + $0x60] sm:$0xff]
  %v76 = vld [vmem:[%s44 + $0x68] sm:$0xff]
  %v77 = vld [vmem:[%s44 + $0x70] sm:$0xff]
  %v78 = vld [vmem:[%s44 + $0x78] sm:$0xff]
  %v79 = vld [vmem:[%s44 + $0x80] sm:$0xff]
  %v80 = vld [vmem:[%s44 + $0x88] sm:$0xff]
  %v81 = vld [vmem:[%s44 + $0x90] sm:$0xff]
  %v82 = vld [vmem:[%s44 + $0x98] sm:$0xff]
  %v83 = vld [vmem:[%s44 + $0xa0] sm:$0xff]
  %v84 = vld [vmem:[%s44 + $0xa8] sm:$0xff]
  %v85 = vld [vmem:[%s44 + $0xb0] sm:$0xff]
  %v86 = vld [vmem:[%s44 + $0xb8] sm:$0xff]
  %v87 = vld [vmem:[%s44 + $0xc0] sm:$0xff]
  %v88 = vld [vmem:[%s44 + $0xc8] sm:$0xff]
  %v89 = vld [vmem:[%s44 + $0xd0] sm:$0xff]
  %v90 = vld [vmem:[%s44 + $0xd8] sm:$0xff]
  %v91 = vld [vmem:[%s44 + $0xe0] sm:$0xff]
  %v92 = vld [vmem:[%s44 + $0xe8] sm:$0xff]
  %v93 = vld [vmem:[%s44 + $0xf0] sm:$0xff]
  %v94 = vld [vmem:[%s44 + $0xf8] sm:$0xff]
  %v95 = vld [vmem:[%s52] sm:$0xff]
  %v96 = vld [vmem:[%s52 + $0x8] sm:$0xff]
  %v97 = vld [vmem:[%s52 + $0x10] sm:$0xff]
  %v98 = vld [vmem:[%s52 + $0x18] sm:$0xff]
  %v99 = vld [vmem:[%s52 + $0x20] sm:$0xff]
  %v100 = vld [vmem:[%s52 + $0x28] sm:$0xff]
  %v101 = vld [vmem:[%s52 + $0x30] sm:$0xff]
  %v102 = vld [vmem:[%s52 + $0x38] sm:$0xff]
  %v103 = vunpack.c.0.s8 %v95
  %v104 = vunpack.c.1.s8 %v95
  %v105 = vunpack.c.2.s8 %v95
  %v106 = vunpack.c.3.s8 %v95
  %v107 = vunpack.c.0.s8 %v96
  %v108 = vunpack.c.1.s8 %v96
  %v109 = vunpack.c.2.s8 %v96
  %v110 = vunpack.c.3.s8 %v96
  %v111 = vunpack.c.0.s8 %v97
  %v112 = vunpack.c.1.s8 %v97
  %v113 = vunpack.c.2.s8 %v97
  %v114 = vunpack.c.3.s8 %v97
  %v115 = vunpack.c.0.s8 %v98
  %v116 = vunpack.c.1.s8 %v98
  %v117 = vunpack.c.2.s8 %v98
  %v118 = vunpack.c.3.s8 %v98
  %v119 = vunpack.c.0.s8 %v99
  %v120 = vunpack.c.1.s8 %v99
  %v121 = vunpack.c.2.s8 %v99
  %v122 = vunpack.c.3.s8 %v99
  %v123 = vunpack.c.0.s8 %v100
  %v124 = vunpack.c.1.s8 %v100
  %v125 = vunpack.c.2.s8 %v100
  %v126 = vunpack.c.3.s8 %v100
  %v127 = vunpack.c.0.s8 %v101
  %v128 = vunpack.c.1.s8 %v101
  %v129 = vunpack.c.2.s8 %v101
  %v130 = vunpack.c.3.s8 %v101
  %v131 = vunpack.c.0.s8 %v102
  %v132 = vunpack.c.1.s8 %v102
  %v133 = vunpack.c.2.s8 %v102
  %v134 = vunpack.c.3.s8 %v102
  %v135 = vcvt.s32.f32 %v103
  %v136 = vcvt.s32.f32 %v104
  %v137 = vcvt.s32.f32 %v105
  %v138 = vcvt.s32.f32 %v106
  %v139 = vcvt.s32.f32 %v107
  %v140 = vcvt.s32.f32 %v108
  %v141 = vcvt.s32.f32 %v109
  %v142 = vcvt.s32.f32 %v110
  %v143 = vcvt.s32.f32 %v111
  %v144 = vcvt.s32.f32 %v112
  %v145 = vcvt.s32.f32 %v113
  %v146 = vcvt.s32.f32 %v114
  %v147 = vcvt.s32.f32 %v115
  %v148 = vcvt.s32.f32 %v116
  %v149 = vcvt.s32.f32 %v117
  %v150 = vcvt.s32.f32 %v118
  %v151 = vcvt.s32.f32 %v119
  %v152 = vcvt.s32.f32 %v120
  %v153 = vcvt.s32.f32 %v121
  %v154 = vcvt.s32.f32 %v122
  %v155 = vcvt.s32.f32 %v123
  %v156 = vcvt.s32.f32 %v124
  %v157 = vcvt.s32.f32 %v125
  %v158 = vcvt.s32.f32 %v126
  %v159 = vcvt.s32.f32 %v127
  %v160 = vcvt.s32.f32 %v128
  %v161 = vcvt.s32.f32 %v129
  %v162 = vcvt.s32.f32 %v130
  %v163 = vcvt.s32.f32 %v131
  %v164 = vcvt.s32.f32 %v132
  %v165 = vcvt.s32.f32 %v133
  %v166 = vcvt.s32.f32 %v134
  %v167 = vand.u32 2147483647, %v63
  %v168 = vand.u32 2147483647, %v64
  %v169 = vand.u32 2147483647, %v65
  %v170 = vand.u32 2147483647, %v66
  %v171 = vand.u32 2147483647, %v67
  %v172 = vand.u32 2147483647, %v68
  %v173 = vand.u32 2147483647, %v69
  %v174 = vand.u32 2147483647, %v70
  %v175 = vand.u32 2147483647, %v71
  %v176 = vand.u32 2147483647, %v72
  %v177 = vand.u32 2147483647, %v73
  %v178 = vand.u32 2147483647, %v74
  %v179 = vand.u32 2147483647, %v75
  %v180 = vand.u32 2147483647, %v76
  %v181 = vand.u32 2147483647, %v77
  %v182 = vand.u32 2147483647, %v78
  %v183 = vand.u32 2147483647, %v79
  %v184 = vand.u32 2147483647, %v80
  %v185 = vand.u32 2147483647, %v81
  %v186 = vand.u32 2147483647, %v82
  %v187 = vand.u32 2147483647, %v83
  %v188 = vand.u32 2147483647, %v84
  %v189 = vand.u32 2147483647, %v85
  %v190 = vand.u32 2147483647, %v86
  %v191 = vand.u32 2147483647, %v87
  %v192 = vand.u32 2147483647, %v88
  %v193 = vand.u32 2147483647, %v89
  %v194 = vand.u32 2147483647, %v90
  %v195 = vand.u32 2147483647, %v91
  %v196 = vand.u32 2147483647, %v92
  %v197 = vand.u32 2147483647, %v93
  %v198 = vand.u32 2147483647, %v94
  %v199 = vsub.f32 0.0, %v167
  %v200 = vsub.f32 0.0, %v168
  %v201 = vsub.f32 0.0, %v169
  %v202 = vsub.f32 0.0, %v170
  %v203 = vsub.f32 0.0, %v171
  %v204 = vsub.f32 0.0, %v172
  %v205 = vsub.f32 0.0, %v173
  %v206 = vsub.f32 0.0, %v174
  %v207 = vsub.f32 0.0, %v175
  %v208 = vsub.f32 0.0, %v176
  %v209 = vsub.f32 0.0, %v177
  %v210 = vsub.f32 0.0, %v178
  %v211 = vsub.f32 0.0, %v179
  %v212 = vsub.f32 0.0, %v180
  %v213 = vsub.f32 0.0, %v181
  %v214 = vsub.f32 0.0, %v182
  %v215 = vsub.f32 0.0, %v183
  %v216 = vsub.f32 0.0, %v184
  %v217 = vsub.f32 0.0, %v185
  %v218 = vsub.f32 0.0, %v186
  %v219 = vsub.f32 0.0, %v187
  %v220 = vsub.f32 0.0, %v188
  %v221 = vsub.f32 0.0, %v189
  %v222 = vsub.f32 0.0, %v190
  %v223 = vsub.f32 0.0, %v191
  %v224 = vsub.f32 0.0, %v192
  %v225 = vsub.f32 0.0, %v193
  %v226 = vsub.f32 0.0, %v194
  %v227 = vsub.f32 0.0, %v195
  %v228 = vsub.f32 0.0, %v196
  %v229 = vsub.f32 0.0, %v197
  %v230 = vsub.f32 0.0, %v198
  %v231 = vmul.f32 %v199, 1.442695
  %v232 = vpow.pop %v231
  %v233 = vmul.f32 %v200, 1.442695
  %v234 = vpow.pop %v233
  %v235 = vmul.f32 %v201, 1.442695
  %v236 = vpow.pop %v235
  %v237 = vmul.f32 %v202, 1.442695
  %v238 = vpow.pop %v237
  %v239 = vmul.f32 %v203, 1.442695
  %v240 = vpow.pop %v239
  %v241 = vmul.f32 %v204, 1.442695
  %v242 = vpow.pop %v241
  %v243 = vmul.f32 %v205, 1.442695
  %v244 = vpow.pop %v243
  %v245 = vmul.f32 %v206, 1.442695
  %v246 = vpow.pop %v245
  %v247 = vmul.f32 %v207, 1.442695
  %v248 = vpow.pop %v247
  %v249 = vmul.f32 %v208, 1.442695
  %v250 = vpow.pop %v249
  %v251 = vmul.f32 %v209, 1.442695
  %v252 = vpow.pop %v251
  %v253 = vmul.f32 %v210, 1.442695
  %v254 = vpow.pop %v253
  %v255 = vmul.f32 %v211, 1.442695
  %v256 = vpow.pop %v255
  %v257 = vmul.f32 %v212, 1.442695
  %v258 = vpow.pop %v257
  %v259 = vmul.f32 %v213, 1.442695
  %v260 = vpow.pop %v259
  %v261 = vmul.f32 %v214, 1.442695
  %v262 = vpow.pop %v261
  %v263 = vmul.f32 %v215, 1.442695
  %v264 = vpow.pop %v263
  %v265 = vmul.f32 %v216, 1.442695
  %v266 = vpow.pop %v265
  %v267 = vmul.f32 %v217, 1.442695
  %v268 = vpow.pop %v267
  %v269 = vmul.f32 %v218, 1.442695
  %v270 = vpow.pop %v269
  %v271 = vmul.f32 %v219, 1.442695
  %v272 = vpow.pop %v271
  %v273 = vmul.f32 %v220, 1.442695
  %v274 = vpow.pop %v273
  %v275 = vmul.f32 %v221, 1.442695
  %v276 = vpow.pop %v275
  %v277 = vmul.f32 %v222, 1.442695
  %v278 = vpow.pop %v277
  %v279 = vmul.f32 %v223, 1.442695
  %v280 = vpow.pop %v279
  %v281 = vmul.f32 %v224, 1.442695
  %v282 = vpow.pop %v281
  %v283 = vmul.f32 %v225, 1.442695
  %v284 = vpow.pop %v283
  %v285 = vmul.f32 %v226, 1.442695
  %v286 = vpow.pop %v285
  %v287 = vmul.f32 %v227, 1.442695
  %v288 = vpow.pop %v287
  %v289 = vmul.f32 %v228, 1.442695
  %v290 = vpow.pop %v289
  %v291 = vmul.f32 %v229, 1.442695
  %v292 = vpow.pop %v291
  %v293 = vmul.f32 %v230, 1.442695
  %v294 = vpow.pop %v293
  %v295 = vadd.f32 %v232, 1.0
  %v296 = vadd.f32 %v234, 1.0
  %v297 = vadd.f32 %v236, 1.0
  %v298 = vadd.f32 %v238, 1.0
  %v299 = vadd.f32 %v240, 1.0
  %v300 = vadd.f32 %v242, 1.0
  %v301 = vadd.f32 %v244, 1.0
  %v302 = vadd.f32 %v246, 1.0
  %v303 = vadd.f32 %v248, 1.0
  %v304 = vadd.f32 %v250, 1.0
  %v305 = vadd.f32 %v252, 1.0
  %v306 = vadd.f32 %v254, 1.0
  %v307 = vadd.f32 %v256, 1.0
  %v308 = vadd.f32 %v258, 1.0
  %v309 = vadd.f32 %v260, 1.0
  %v310 = vadd.f32 %v262, 1.0
  %v311 = vadd.f32 %v264, 1.0
  %v312 = vadd.f32 %v266, 1.0
  %v313 = vadd.f32 %v268, 1.0
  %v314 = vadd.f32 %v270, 1.0
  %v315 = vadd.f32 %v272, 1.0
  %v316 = vadd.f32 %v274, 1.0
  %v317 = vadd.f32 %v276, 1.0
  %v318 = vadd.f32 %v278, 1.0
  %v319 = vadd.f32 %v280, 1.0
  %v320 = vadd.f32 %v282, 1.0
  %v321 = vadd.f32 %v284, 1.0
  %v322 = vadd.f32 %v286, 1.0
  %v323 = vadd.f32 %v288, 1.0
  %v324 = vadd.f32 %v290, 1.0
  %v325 = vadd.f32 %v292, 1.0
  %v326 = vadd.f32 %v294, 1.0
  %v327 = vrcp.pop %v295
  %v328 = vrcp.pop %v296
  %v329 = vrcp.pop %v297
  %v330 = vrcp.pop %v298
  %v331 = vrcp.pop %v299
  %v332 = vrcp.pop %v300
  %v333 = vrcp.pop %v301
  %v334 = vrcp.pop %v302
  %v335 = vrcp.pop %v303
  %v336 = vrcp.pop %v304
  %v337 = vrcp.pop %v305
  %v338 = vrcp.pop %v306
  %v339 = vrcp.pop %v307
  %v340 = vrcp.pop %v308
  %v341 = vrcp.pop %v309
  %v342 = vrcp.pop %v310
  %v343 = vrcp.pop %v311
  %v344 = vrcp.pop %v312
  %v345 = vrcp.pop %v313
  %v346 = vrcp.pop %v314
  %v347 = vrcp.pop %v315
  %v348 = vrcp.pop %v316
  %v349 = vrcp.pop %v317
  %v350 = vrcp.pop %v318
  %v351 = vrcp.pop %v319
  %v352 = vrcp.pop %v320
  %v353 = vrcp.pop %v321
  %v354 = vrcp.pop %v322
  %v355 = vrcp.pop %v323
  %v356 = vrcp.pop %v324
  %v357 = vrcp.pop %v325
  %v358 = vrcp.pop %v326
  %v359 = vmul.f32 %v232, %v327
  %v360 = vmul.f32 %v234, %v328
  %v361 = vmul.f32 %v236, %v329
  %v362 = vmul.f32 %v238, %v330
  %v363 = vmul.f32 %v240, %v331
  %v364 = vmul.f32 %v242, %v332
  %v365 = vmul.f32 %v244, %v333
  %v366 = vmul.f32 %v246, %v334
  %v367 = vmul.f32 %v248, %v335
  %v368 = vmul.f32 %v250, %v336
  %v369 = vmul.f32 %v252, %v337
  %v370 = vmul.f32 %v254, %v338
  %v371 = vmul.f32 %v256, %v339
  %v372 = vmul.f32 %v258, %v340
  %v373 = vmul.f32 %v260, %v341
  %v374 = vmul.f32 %v262, %v342
  %v375 = vmul.f32 %v264, %v343
  %v376 = vmul.f32 %v266, %v344
  %v377 = vmul.f32 %v268, %v345
  %v378 = vmul.f32 %v270, %v346
  %v379 = vmul.f32 %v272, %v347
  %v380 = vmul.f32 %v274, %v348
  %v381 = vmul.f32 %v276, %v349
  %v382 = vmul.f32 %v278, %v350
  %v383 = vmul.f32 %v280, %v351
  %v384 = vmul.f32 %v282, %v352
  %v385 = vmul.f32 %v284, %v353
  %v386 = vmul.f32 %v286, %v354
  %v387 = vmul.f32 %v288, %v355
  %v388 = vmul.f32 %v290, %v356
  %v389 = vmul.f32 %v292, %v357
  %v390 = vmul.f32 %v294, %v358
  %vm391 = vcmp.ge.f32.partialorder %v63, 0.0
  %vm392 = vcmp.ge.f32.partialorder %v64, 0.0
  %vm393 = vcmp.ge.f32.partialorder %v65, 0.0
  %vm394 = vcmp.ge.f32.partialorder %v66, 0.0
  %vm395 = vcmp.ge.f32.partialorder %v67, 0.0
  %vm396 = vcmp.ge.f32.partialorder %v68, 0.0
  %vm397 = vcmp.ge.f32.partialorder %v69, 0.0
  %vm398 = vcmp.ge.f32.partialorder %v70, 0.0
  %vm399 = vcmp.ge.f32.partialorder %v71, 0.0
  %vm400 = vcmp.ge.f32.partialorder %v72, 0.0
  %vm401 = vcmp.ge.f32.partialorder %v73, 0.0
  %vm402 = vcmp.ge.f32.partialorder %v74, 0.0
  %vm403 = vcmp.ge.f32.partialorder %v75, 0.0
  %vm404 = vcmp.ge.f32.partialorder %v76, 0.0
  %vm405 = vcmp.ge.f32.partialorder %v77, 0.0
  %vm406 = vcmp.ge.f32.partialorder %v78, 0.0
  %vm407 = vcmp.ge.f32.partialorder %v79, 0.0
  %vm408 = vcmp.ge.f32.partialorder %v80, 0.0
  %vm409 = vcmp.ge.f32.partialorder %v81, 0.0
  %vm410 = vcmp.ge.f32.partialorder %v82, 0.0
  %vm411 = vcmp.ge.f32.partialorder %v83, 0.0
  %vm412 = vcmp.ge.f32.partialorder %v84, 0.0
  %vm413 = vcmp.ge.f32.partialorder %v85, 0.0
  %vm414 = vcmp.ge.f32.partialorder %v86, 0.0
  %vm415 = vcmp.ge.f32.partialorder %v87, 0.0
  %vm416 = vcmp.ge.f32.partialorder %v88, 0.0
  %vm417 = vcmp.ge.f32.partialorder %v89, 0.0
  %vm418 = vcmp.ge.f32.partialorder %v90, 0.0
  %vm419 = vcmp.ge.f32.partialorder %v91, 0.0
  %vm420 = vcmp.ge.f32.partialorder %v92, 0.0
  %vm421 = vcmp.ge.f32.partialorder %v93, 0.0
  %vm422 = vcmp.ge.f32.partialorder %v94, 0.0
  %v423 = vsel %vm391, %v327, %v359
  %v424 = vsel %vm392, %v328, %v360
  %v425 = vsel %vm393, %v329, %v361
  %v426 = vsel %vm394, %v330, %v362
  %v427 = vsel %vm395, %v331, %v363
  %v428 = vsel %vm396, %v332, %v364
  %v429 = vsel %vm397, %v333, %v365
  %v430 = vsel %vm398, %v334, %v366
  %v431 = vsel %vm399, %v335, %v367
  %v432 = vsel %vm400, %v336, %v368
  %v433 = vsel %vm401, %v337, %v369
  %v434 = vsel %vm402, %v338, %v370
  %v435 = vsel %vm403, %v339, %v371
  %v436 = vsel %vm404, %v340, %v372
  %v437 = vsel %vm405, %v341, %v373
  %v438 = vsel %vm406, %v342, %v374
  %v439 = vsel %vm407, %v343, %v375
  %v440 = vsel %vm408, %v344, %v376
  %v441 = vsel %vm409, %v345, %v377
  %v442 = vsel %vm410, %v346, %v378
  %v443 = vsel %vm411, %v347, %v379
  %v444 = vsel %vm412, %v348, %v380
  %v445 = vsel %vm413, %v349, %v381
  %v446 = vsel %vm414, %v350, %v382
  %v447 = vsel %vm415, %v351, %v383
  %v448 = vsel %vm416, %v352, %v384
  %v449 = vsel %vm417, %v353, %v385
  %v450 = vsel %vm418, %v354, %v386
  %v451 = vsel %vm419, %v355, %v387
  %v452 = vsel %vm420, %v356, %v388
  %v453 = vsel %vm421, %v357, %v389
  %v454 = vsel %vm422, %v358, %v390
  %v455 = vlog2.pop %v295
  %v456 = vmul.f32 %v455, 0.6931472
  %v457 = vlog2.pop %v296
  %v458 = vmul.f32 %v457, 0.6931472
  %v459 = vlog2.pop %v297
  %v460 = vmul.f32 %v459, 0.6931472
  %v461 = vlog2.pop %v298
  %v462 = vmul.f32 %v461, 0.6931472
  %v463 = vlog2.pop %v299
  %v464 = vmul.f32 %v463, 0.6931472
  %v465 = vlog2.pop %v300
  %v466 = vmul.f32 %v465, 0.6931472
  %v467 = vlog2.pop %v301
  %v468 = vmul.f32 %v467, 0.6931472
  %v469 = vlog2.pop %v302
  %v470 = vmul.f32 %v469, 0.6931472
  %v471 = vlog2.pop %v303
  %v472 = vmul.f32 %v471, 0.6931472
  %v473 = vlog2.pop %v304
  %v474 = vmul.f32 %v473, 0.6931472
  %v475 = vlog2.pop %v305
  %v476 = vmul.f32 %v475, 0.6931472
  %v477 = vlog2.pop %v306
  %v478 = vmul.f32 %v477, 0.6931472
  %v479 = vlog2.pop %v307
  %v480 = vmul.f32 %v479, 0.6931472
  %v481 = vlog2.pop %v308
  %v482 = vmul.f32 %v481, 0.6931472
  %v483 = vlog2.pop %v309
  %v484 = vmul.f32 %v483, 0.6931472
  %v485 = vlog2.pop %v310
  %v486 = vmul.f32 %v485, 0.6931472
  %v487 = vlog2.pop %v311
  %v488 = vmul.f32 %v487, 0.6931472
  %v489 = vlog2.pop %v312
  %v490 = vmul.f32 %v489, 0.6931472
  %v491 = vlog2.pop %v313
  %v492 = vmul.f32 %v491, 0.6931472
  %v493 = vlog2.pop %v314
  %v494 = vmul.f32 %v493, 0.6931472
  %v495 = vlog2.pop %v315
  %v496 = vmul.f32 %v495, 0.6931472
  %v497 = vlog2.pop %v316
  %v498 = vmul.f32 %v497, 0.6931472
  %v499 = vlog2.pop %v317
  %v500 = vmul.f32 %v499, 0.6931472
  %v501 = vlog2.pop %v318
  %v502 = vmul.f32 %v501, 0.6931472
  %v503 = vlog2.pop %v319
  %v504 = vmul.f32 %v503, 0.6931472
  %v505 = vlog2.pop %v320
  %v506 = vmul.f32 %v505, 0.6931472
  %v507 = vlog2.pop %v321
  %v508 = vmul.f32 %v507, 0.6931472
  %v509 = vlog2.pop %v322
  %v510 = vmul.f32 %v509, 0.6931472
  %v511 = vlog2.pop %v323
  %v512 = vmul.f32 %v511, 0.6931472
  %v513 = vlog2.pop %v324
  %v514 = vmul.f32 %v513, 0.6931472
  %v515 = vlog2.pop %v325
  %v516 = vmul.f32 %v515, 0.6931472
  %v517 = vlog2.pop %v326
  %v518 = vmul.f32 %v517, 0.6931472
  %v519 = vmul.f32 %v135, 2.0
  %v520 = vmul.f32 %v136, 2.0
  %v521 = vmul.f32 %v137, 2.0
  %v522 = vmul.f32 %v138, 2.0
  %v523 = vmul.f32 %v139, 2.0
  %v524 = vmul.f32 %v140, 2.0
  %v525 = vmul.f32 %v141, 2.0
  %v526 = vmul.f32 %v142, 2.0
  %v527 = vmul.f32 %v143, 2.0
  %v528 = vmul.f32 %v144, 2.0
  %v529 = vmul.f32 %v145, 2.0
  %v530 = vmul.f32 %v146, 2.0
  %v531 = vmul.f32 %v147, 2.0
  %v532 = vmul.f32 %v148, 2.0
  %v533 = vmul.f32 %v149, 2.0
  %v534 = vmul.f32 %v150, 2.0
  %v535 = vmul.f32 %v151, 2.0
  %v536 = vmul.f32 %v152, 2.0
  %v537 = vmul.f32 %v153, 2.0
  %v538 = vmul.f32 %v154, 2.0
  %v539 = vmul.f32 %v155, 2.0
  %v540 = vmul.f32 %v156, 2.0
  %v541 = vmul.f32 %v157, 2.0
  %v542 = vmul.f32 %v158, 2.0
  %v543 = vmul.f32 %v159, 2.0
  %v544 = vmul.f32 %v160, 2.0
  %v545 = vmul.f32 %v161, 2.0
  %v546 = vmul.f32 %v162, 2.0
  %v547 = vmul.f32 %v163, 2.0
  %v548 = vmul.f32 %v164, 2.0
  %v549 = vmul.f32 %v165, 2.0
  %v550 = vmul.f32 %v166, 2.0
  %v551 = vsub.f32 1.0, %v519
  %v552 = vsub.f32 1.0, %v520
  %v553 = vsub.f32 1.0, %v521
  %v554 = vsub.f32 1.0, %v522
  %v555 = vsub.f32 1.0, %v523
  %v556 = vsub.f32 1.0, %v524
  %v557 = vsub.f32 1.0, %v525
  %v558 = vsub.f32 1.0, %v526
  %v559 = vsub.f32 1.0, %v527
  %v560 = vsub.f32 1.0, %v528
  %v561 = vsub.f32 1.0, %v529
  %v562 = vsub.f32 1.0, %v530
  %v563 = vsub.f32 1.0, %v531
  %v564 = vsub.f32 1.0, %v532
  %v565 = vsub.f32 1.0, %v533
  %v566 = vsub.f32 1.0, %v534
  %v567 = vsub.f32 1.0, %v535
  %v568 = vsub.f32 1.0, %v536
  %v569 = vsub.f32 1.0, %v537
  %v570 = vsub.f32 1.0, %v538
  %v571 = vsub.f32 1.0, %v539
  %v572 = vsub.f32 1.0, %v540
  %v573 = vsub.f32 1.0, %v541
  %v574 = vsub.f32 1.0, %v542
  %v575 = vsub.f32 1.0, %v543
  %v576 = vsub.f32 1.0, %v544
  %v577 = vsub.f32 1.0, %v545
  %v578 = vsub.f32 1.0, %v546
  %v579 = vsub.f32 1.0, %v547
  %v580 = vsub.f32 1.0, %v548
  %v581 = vsub.f32 1.0, %v549
  %v582 = vsub.f32 1.0, %v550
  %v583 = vmul.f32 %v63, %v551
  %v584 = vmul.f32 %v64, %v552
  %v585 = vmul.f32 %v65, %v553
  %v586 = vmul.f32 %v66, %v554
  %v587 = vmul.f32 %v67, %v555
  %v588 = vmul.f32 %v68, %v556
  %v589 = vmul.f32 %v69, %v557
  %v590 = vmul.f32 %v70, %v558
  %v591 = vmul.f32 %v71, %v559
  %v592 = vmul.f32 %v72, %v560
  %v593 = vmul.f32 %v73, %v561
  %v594 = vmul.f32 %v74, %v562
  %v595 = vmul.f32 %v75, %v563
  %v596 = vmul.f32 %v76, %v564
  %v597 = vmul.f32 %v77, %v565
  %v598 = vmul.f32 %v78, %v566
  %v599 = vmul.f32 %v79, %v567
  %v600 = vmul.f32 %v80, %v568
  %v601 = vmul.f32 %v81, %v569
  %v602 = vmul.f32 %v82, %v570
  %v603 = vmul.f32 %v83, %v571
  %v604 = vmul.f32 %v84, %v572
  %v605 = vmul.f32 %v85, %v573
  %v606 = vmul.f32 %v86, %v574
  %v607 = vmul.f32 %v87, %v575
  %v608 = vmul.f32 %v88, %v576
  %v609 = vmul.f32 %v89, %v577
  %v610 = vmul.f32 %v90, %v578
  %v611 = vmul.f32 %v91, %v579
  %v612 = vmul.f32 %v92, %v580
  %v613 = vmul.f32 %v93, %v581
  %v614 = vmul.f32 %v94, %v582
  %v615 = vmax.f32 %v583, 0.0
  %v616 = vmax.f32 %v584, 0.0
  %v617 = vmax.f32 %v585, 0.0
  %v618 = vmax.f32 %v586, 0.0
  %v619 = vmax.f32 %v587, 0.0
  %v620 = vmax.f32 %v588, 0.0
  %v621 = vmax.f32 %v589, 0.0
  %v622 = vmax.f32 %v590, 0.0
  %v623 = vmax.f32 %v591, 0.0
  %v624 = vmax.f32 %v592, 0.0
  %v625 = vmax.f32 %v593, 0.0
  %v626 = vmax.f32 %v594, 0.0
  %v627 = vmax.f32 %v595, 0.0
  %v628 = vmax.f32 %v596, 0.0
  %v629 = vmax.f32 %v597, 0.0
  %v630 = vmax.f32 %v598, 0.0
  %v631 = vmax.f32 %v599, 0.0
  %v632 = vmax.f32 %v600, 0.0
  %v633 = vmax.f32 %v601, 0.0
  %v634 = vmax.f32 %v602, 0.0
  %v635 = vmax.f32 %v603, 0.0
  %v636 = vmax.f32 %v604, 0.0
  %v637 = vmax.f32 %v605, 0.0
  %v638 = vmax.f32 %v606, 0.0
  %v639 = vmax.f32 %v607, 0.0
  %v640 = vmax.f32 %v608, 0.0
  %v641 = vmax.f32 %v609, 0.0
  %v642 = vmax.f32 %v610, 0.0
  %v643 = vmax.f32 %v611, 0.0
  %v644 = vmax.f32 %v612, 0.0
  %v645 = vmax.f32 %v613, 0.0
  %v646 = vmax.f32 %v614, 0.0
  %v647 = vadd.f32 %v615, %v456
  %v648 = vadd.f32 %v616, %v458
  %v649 = vadd.f32 %v617, %v460
  %v650 = vadd.f32 %v618, %v462
  %v651 = vadd.f32 %v619, %v464
  %v652 = vadd.f32 %v620, %v466
  %v653 = vadd.f32 %v621, %v468
  %v654 = vadd.f32 %v622, %v470
  %v655 = vadd.f32 %v623, %v472
  %v656 = vadd.f32 %v624, %v474
  %v657 = vadd.f32 %v625, %v476
  %v658 = vadd.f32 %v626, %v478
  %v659 = vadd.f32 %v627, %v480
  %v660 = vadd.f32 %v628, %v482
  %v661 = vadd.f32 %v629, %v484
  %v662 = vadd.f32 %v630, %v486
  %v663 = vadd.f32 %v631, %v488
  %v664 = vadd.f32 %v632, %v490
  %v665 = vadd.f32 %v633, %v492
  %v666 = vadd.f32 %v634, %v494
  %v667 = vadd.f32 %v635, %v496
  %v668 = vadd.f32 %v636, %v498
  %v669 = vadd.f32 %v637, %v500
  %v670 = vadd.f32 %v638, %v502
  %v671 = vadd.f32 %v639, %v504
  %v672 = vadd.f32 %v640, %v506
  %v673 = vadd.f32 %v641, %v508
  %v674 = vadd.f32 %v642, %v510
  %v675 = vadd.f32 %v643, %v512
  %v676 = vadd.f32 %v644, %v514
  %v677 = vadd.f32 %v645, %v516
  %v678 = vadd.f32 %v646, %v518
  %vm679 = vcmp.ge.f32.partialorder %v583, 0.0
  %vm680 = vcmp.ge.f32.partialorder %v584, 0.0
  %vm681 = vcmp.ge.f32.partialorder %v585, 0.0
  %vm682 = vcmp.ge.f32.partialorder %v586, 0.0
  %vm683 = vcmp.ge.f32.partialorder %v587, 0.0
  %vm684 = vcmp.ge.f32.partialorder %v588, 0.0
  %vm685 = vcmp.ge.f32.partialorder %v589, 0.0
  %vm686 = vcmp.ge.f32.partialorder %v590, 0.0
  %vm687 = vcmp.ge.f32.partialorder %v591, 0.0
  %vm688 = vcmp.ge.f32.partialorder %v592, 0.0
  %vm689 = vcmp.ge.f32.partialorder %v593, 0.0
  %vm690 = vcmp.ge.f32.partialorder %v594, 0.0
  %vm691 = vcmp.ge.f32.partialorder %v595, 0.0
  %vm692 = vcmp.ge.f32.partialorder %v596, 0.0
  %vm693 = vcmp.ge.f32.partialorder %v597, 0.0
  %vm694 = vcmp.ge.f32.partialorder %v598, 0.0
  %vm695 = vcmp.ge.f32.partialorder %v599, 0.0
  %vm696 = vcmp.ge.f32.partialorder %v600, 0.0
  %vm697 = vcmp.ge.f32.partialorder %v601, 0.0
  %vm698 = vcmp.ge.f32.partialorder %v602, 0.0
  %vm699 = vcmp.ge.f32.partialorder %v603, 0.0
  %vm700 = vcmp.ge.f32.partialorder %v604, 0.0
  %vm701 = vcmp.ge.f32.partialorder %v605, 0.0
  %vm702 = vcmp.ge.f32.partialorder %v606, 0.0
  %vm703 = vcmp.ge.f32.partialorder %v607, 0.0
  %vm704 = vcmp.ge.f32.partialorder %v608, 0.0
  %vm705 = vcmp.ge.f32.partialorder %v609, 0.0
  %vm706 = vcmp.ge.f32.partialorder %v610, 0.0
  %vm707 = vcmp.ge.f32.partialorder %v611, 0.0
  %vm708 = vcmp.ge.f32.partialorder %v612, 0.0
  %vm709 = vcmp.ge.f32.partialorder %v613, 0.0
  %vm710 = vcmp.ge.f32.partialorder %v614, 0.0
  %v711 = vsel %vm679, %v327, %v359
  %v712 = vsel %vm680, %v328, %v360
  %v713 = vsel %vm681, %v329, %v361
  %v714 = vsel %vm682, %v330, %v362
  %v715 = vsel %vm683, %v331, %v363
  %v716 = vsel %vm684, %v332, %v364
  %v717 = vsel %vm685, %v333, %v365
  %v718 = vsel %vm686, %v334, %v366
  %v719 = vsel %vm687, %v335, %v367
  %v720 = vsel %vm688, %v336, %v368
  %v721 = vsel %vm689, %v337, %v369
  %v722 = vsel %vm690, %v338, %v370
  %v723 = vsel %vm691, %v339, %v371
  %v724 = vsel %vm692, %v340, %v372
  %v725 = vsel %vm693, %v341, %v373
  %v726 = vsel %vm694, %v342, %v374
  %v727 = vsel %vm695, %v343, %v375
  %v728 = vsel %vm696, %v344, %v376
  %v729 = vsel %vm697, %v345, %v377
  %v730 = vsel %vm698, %v346, %v378
  %v731 = vsel %vm699, %v347, %v379
  %v732 = vsel %vm700, %v348, %v380
  %v733 = vsel %vm701, %v349, %v381
  %v734 = vsel %vm702, %v350, %v382
  %v735 = vsel %vm703, %v351, %v383
  %v736 = vsel %vm704, %v352, %v384
  %v737 = vsel %vm705, %v353, %v385
  %v738 = vsel %vm706, %v354, %v386
  %v739 = vsel %vm707, %v355, %v387
  %v740 = vsel %vm708, %v356, %v388
  %v741 = vsel %vm709, %v357, %v389
  %v742 = vsel %vm710, %v358, %v390
  %v743 = vmul.f32 %v711, %v711
  %v744 = vmul.f32 %v712, %v712
  %v745 = vmul.f32 %v713, %v713
  %v746 = vmul.f32 %v714, %v714
  %v747 = vmul.f32 %v715, %v715
  %v748 = vmul.f32 %v716, %v716
  %v749 = vmul.f32 %v717, %v717
  %v750 = vmul.f32 %v718, %v718
  %v751 = vmul.f32 %v719, %v719
  %v752 = vmul.f32 %v720, %v720
  %v753 = vmul.f32 %v721, %v721
  %v754 = vmul.f32 %v722, %v722
  %v755 = vmul.f32 %v723, %v723
  %v756 = vmul.f32 %v724, %v724
  %v757 = vmul.f32 %v725, %v725
  %v758 = vmul.f32 %v726, %v726
  %v759 = vmul.f32 %v727, %v727
  %v760 = vmul.f32 %v728, %v728
  %v761 = vmul.f32 %v729, %v729
  %v762 = vmul.f32 %v730, %v730
  %v763 = vmul.f32 %v731, %v731
  %v764 = vmul.f32 %v732, %v732
  %v765 = vmul.f32 %v733, %v733
  %v766 = vmul.f32 %v734, %v734
  %v767 = vmul.f32 %v735, %v735
  %v768 = vmul.f32 %v736, %v736
  %v769 = vmul.f32 %v737, %v737
  %v770 = vmul.f32 %v738, %v738
  %v771 = vmul.f32 %v739, %v739
  %v772 = vmul.f32 %v740, %v740
  %v773 = vmul.f32 %v741, %v741
  %v774 = vmul.f32 %v742, %v742
  %v775 = vmul.f32 %v743, %v647
  %v776 = vmul.f32 %v744, %v648
  %v777 = vmul.f32 %v745, %v649
  %v778 = vmul.f32 %v746, %v650
  %v779 = vmul.f32 %v747, %v651
  %v780 = vmul.f32 %v748, %v652
  %v781 = vmul.f32 %v749, %v653
  %v782 = vmul.f32 %v750, %v654
  %v783 = vmul.f32 %v751, %v655
  %v784 = vmul.f32 %v752, %v656
  %v785 = vmul.f32 %v753, %v657
  %v786 = vmul.f32 %v754, %v658
  %v787 = vmul.f32 %v755, %v659
  %v788 = vmul.f32 %v756, %v660
  %v789 = vmul.f32 %v757, %v661
  %v790 = vmul.f32 %v758, %v662
  %v791 = vmul.f32 %v759, %v663
  %v792 = vmul.f32 %v760, %v664
  %v793 = vmul.f32 %v761, %v665
  %v794 = vmul.f32 %v762, %v666
  %v795 = vmul.f32 %v763, %v667
  %v796 = vmul.f32 %v764, %v668
  %v797 = vmul.f32 %v765, %v669
  %v798 = vmul.f32 %v766, %v670
  %v799 = vmul.f32 %v767, %v671
  %v800 = vmul.f32 %v768, %v672
  %v801 = vmul.f32 %v769, %v673
  %v802 = vmul.f32 %v770, %v674
  %v803 = vmul.f32 %v771, %v675
  %v804 = vmul.f32 %v772, %v676
  %v805 = vmul.f32 %v773, %v677
  %v806 = vmul.f32 %v774, %v678
  %v807 = vmul.f32 %v135, %v423
  %v808 = vmul.f32 %v136, %v424
  %v809 = vmul.f32 %v137, %v425
  %v810 = vmul.f32 %v138, %v426
  %v811 = vmul.f32 %v139, %v427
  %v812 = vmul.f32 %v140, %v428
  %v813 = vmul.f32 %v141, %v429
  %v814 = vmul.f32 %v142, %v430
  %v815 = vmul.f32 %v143, %v431
  %v816 = vmul.f32 %v144, %v432
  %v817 = vmul.f32 %v145, %v433
  %v818 = vmul.f32 %v146, %v434
  %v819 = vmul.f32 %v147, %v435
  %v820 = vmul.f32 %v148, %v436
  %v821 = vmul.f32 %v149, %v437
  %v822 = vmul.f32 %v150, %v438
  %v823 = vmul.f32 %v151, %v439
  %v824 = vmul.f32 %v152, %v440
  %v825 = vmul.f32 %v153, %v441
  %v826 = vmul.f32 %v154, %v442
  %v827 = vmul.f32 %v155, %v443
  %v828 = vmul.f32 %v156, %v444
  %v829 = vmul.f32 %v157, %v445
  %v830 = vmul.f32 %v158, %v446
  %v831 = vmul.f32 %v159, %v447
  %v832 = vmul.f32 %v160, %v448
  %v833 = vmul.f32 %v161, %v449
  %v834 = vmul.f32 %v162, %v450
  %v835 = vmul.f32 %v163, %v451
  %v836 = vmul.f32 %v164, %v452
  %v837 = vmul.f32 %v165, %v453
  %v838 = vmul.f32 %v166, %v454
  %v839 = vld [vmem:[%s2] sm:$0xff]
  %v840 = vadd.f32 %v807, %v808
  %v841 = vadd.f32 %v840, %v809
  %v842 = vadd.f32 %v841, %v810
  %v843 = vadd.f32 %v842, %v811
  %v844 = vadd.f32 %v843, %v812
  %v845 = vadd.f32 %v844, %v813
  %v846 = vadd.f32 %v845, %v814
  %v847 = vadd.f32 %v846, %v815
  %v848 = vadd.f32 %v847, %v816
  %v849 = vadd.f32 %v848, %v817
  %v850 = vadd.f32 %v849, %v818
  %v851 = vadd.f32 %v850, %v819
  %v852 = vadd.f32 %v851, %v820
  %v853 = vadd.f32 %v852, %v821
  %v854 = vadd.f32 %v853, %v822
  %v855 = vadd.f32 %v854, %v823
  %v856 = vadd.f32 %v855, %v824
  %v857 = vadd.f32 %v856, %v825
  %v858 = vadd.f32 %v857, %v826
  %v859 = vadd.f32 %v858, %v827
  %v860 = vadd.f32 %v859, %v828
  %v861 = vadd.f32 %v860, %v829
  %v862 = vadd.f32 %v861, %v830
  %v863 = vadd.f32 %v862, %v831
  %v864 = vadd.f32 %v863, %v832
  %v865 = vadd.f32 %v864, %v833
  %v866 = vadd.f32 %v865, %v834
  %v867 = vadd.f32 %v866, %v835
  %v868 = vadd.f32 %v867, %v836
  %v869 = vadd.f32 %v868, %v837
  %v870 = vadd.f32 %v869, %v838
  %v871 = vadd.f32 %v839, %v870
  %872 = vst [vmem:[%s2] sm:$0xff] %v871
  %s873 = scalar_lea.vmem %s2, 8
  %v874 = vld [vmem:[%s873] sm:$0xff]
  %v875 = vadd.f32 %v423, %v424
  %v876 = vadd.f32 %v875, %v425
  %v877 = vadd.f32 %v876, %v426
  %v878 = vadd.f32 %v877, %v427
  %v879 = vadd.f32 %v878, %v428
  %v880 = vadd.f32 %v879, %v429
  %v881 = vadd.f32 %v880, %v430
  %v882 = vadd.f32 %v881, %v431
  %v883 = vadd.f32 %v882, %v432
  %v884 = vadd.f32 %v883, %v433
  %v885 = vadd.f32 %v884, %v434
  %v886 = vadd.f32 %v885, %v435
  %v887 = vadd.f32 %v886, %v436
  %v888 = vadd.f32 %v887, %v437
  %v889 = vadd.f32 %v888, %v438
  %v890 = vadd.f32 %v889, %v439
  %v891 = vadd.f32 %v890, %v440
  %v892 = vadd.f32 %v891, %v441
  %v893 = vadd.f32 %v892, %v442
  %v894 = vadd.f32 %v893, %v443
  %v895 = vadd.f32 %v894, %v444
  %v896 = vadd.f32 %v895, %v445
  %v897 = vadd.f32 %v896, %v446
  %v898 = vadd.f32 %v897, %v447
  %v899 = vadd.f32 %v898, %v448
  %v900 = vadd.f32 %v899, %v449
  %v901 = vadd.f32 %v900, %v450
  %v902 = vadd.f32 %v901, %v451
  %v903 = vadd.f32 %v902, %v452
  %v904 = vadd.f32 %v903, %v453
  %v905 = vadd.f32 %v904, %v454
  %v906 = vadd.f32 %v874, %v905
  %907 = vst [vmem:[%s873] sm:$0xff] %v906
  %s908 = scalar_lea.vmem %s2, 16
  %v909 = vld [vmem:[%s908] sm:$0xff]
  %v910 = vadd.f32 %v135, %v136
  %v911 = vadd.f32 %v910, %v137
  %v912 = vadd.f32 %v911, %v138
  %v913 = vadd.f32 %v912, %v139
  %v914 = vadd.f32 %v913, %v140
  %v915 = vadd.f32 %v914, %v141
  %v916 = vadd.f32 %v915, %v142
  %v917 = vadd.f32 %v916, %v143
  %v918 = vadd.f32 %v917, %v144
  %v919 = vadd.f32 %v918, %v145
  %v920 = vadd.f32 %v919, %v146
  %v921 = vadd.f32 %v920, %v147
  %v922 = vadd.f32 %v921, %v148
  %v923 = vadd.f32 %v922, %v149
  %v924 = vadd.f32 %v923, %v150
  %v925 = vadd.f32 %v924, %v151
  %v926 = vadd.f32 %v925, %v152
  %v927 = vadd.f32 %v926, %v153
  %v928 = vadd.f32 %v927, %v154
  %v929 = vadd.f32 %v928, %v155
  %v930 = vadd.f32 %v929, %v156
  %v931 = vadd.f32 %v930, %v157
  %v932 = vadd.f32 %v931, %v158
  %v933 = vadd.f32 %v932, %v159
  %v934 = vadd.f32 %v933, %v160
  %v935 = vadd.f32 %v934, %v161
  %v936 = vadd.f32 %v935, %v162
  %v937 = vadd.f32 %v936, %v163
  %v938 = vadd.f32 %v937, %v164
  %v939 = vadd.f32 %v938, %v165
  %v940 = vadd.f32 %v939, %v166
  %v941 = vadd.f32 %v909, %v940
  %942 = vst [vmem:[%s908] sm:$0xff] %v941
  %s943 = scalar_lea.vmem %s2, 24
  %v944 = vld [vmem:[%s943] sm:$0xff]
  %v945 = vadd.f32 %v775, %v776
  %v946 = vadd.f32 %v945, %v777
  %v947 = vadd.f32 %v946, %v778
  %v948 = vadd.f32 %v947, %v779
  %v949 = vadd.f32 %v948, %v780
  %v950 = vadd.f32 %v949, %v781
  %v951 = vadd.f32 %v950, %v782
  %v952 = vadd.f32 %v951, %v783
  %v953 = vadd.f32 %v952, %v784
  %v954 = vadd.f32 %v953, %v785
  %v955 = vadd.f32 %v954, %v786
  %v956 = vadd.f32 %v955, %v787
  %v957 = vadd.f32 %v956, %v788
  %v958 = vadd.f32 %v957, %v789
  %v959 = vadd.f32 %v958, %v790
  %v960 = vadd.f32 %v959, %v791
  %v961 = vadd.f32 %v960, %v792
  %v962 = vadd.f32 %v961, %v793
  %v963 = vadd.f32 %v962, %v794
  %v964 = vadd.f32 %v963, %v795
  %v965 = vadd.f32 %v964, %v796
  %v966 = vadd.f32 %v965, %v797
  %v967 = vadd.f32 %v966, %v798
  %v968 = vadd.f32 %v967, %v799
  %v969 = vadd.f32 %v968, %v800
  %v970 = vadd.f32 %v969, %v801
  %v971 = vadd.f32 %v970, %v802
  %v972 = vadd.f32 %v971, %v803
  %v973 = vadd.f32 %v972, %v804
  %v974 = vadd.f32 %v973, %v805
  %v975 = vadd.f32 %v974, %v806
  %v976 = vadd.f32 %v944, %v975
  %977 = vst [vmem:[%s943] sm:$0xff] %v976
  // Predicated region
  $region14: #{dice_focal_loss.1} parent=0 // pred_check
    _
  $region15: #{dice_focal_loss.1} parent=0 // pred_check_branch
    %979 = sbr.rel (0) target = $region17
  $region16: #{dice_focal_loss.1} parent=0 // pred_region
    _
  $region17: #{dice_focal_loss.1} parent=0 // pred_fallthru
    _
  // Predicated region
  $region18: #{dice_focal_loss.1} parent=0 // pred_check
    _
  $region19: #{dice_focal_loss.1} parent=0 // pred_check_branch
    %981 = sbr.rel (0) target = $region21
  $region20: #{dice_focal_loss.1} parent=0 // pred_region
    _
  $region21: #{dice_focal_loss.1} parent=0 // pred_fallthru
    _

</llo_original>
